<compile_context>
chip_gen: v5e
topology: v5e:2x2
jax: 0.10.0
libtpu: 0.0.40
codegen_flags: <defaults>
</compile_context>

<pallas_src>
import jax
import jax.numpy as jnp
import numpy as np
from jax.experimental import pallas as pl
from jax.experimental.pallas import tpu as pltpu  # noqa: F401  (TPU backend)

EPS = 1e-5  # nn.BatchNorm2d default eps


# ------------------------------ Pallas kernel ------------------------------

def _basic_block_kernel(x_ref, w1t_ref, w2t_ref, e1r_ref, e1b_ref, e2b_ref,
                        prm_ref, out_ref):
    # x_ref   : [N, CHW_PAD]   f32   input, NCHW-flattened, zero lane padding
    # w1t_ref : [CHW_PAD, P*9] bf16  conv1 Toeplitz weights (zero pad rows)
    # w2t_ref : [P*9, P]       bf16  conv2 weights, rows ordered (c, ki, kj)
    # e1r_ref : [P*9, P]       f32   0/1 per-channel column-sum reducer
    # e1b_ref : [P, P*9]       bf16  0/1 channel -> conv1-column broadcaster
    # e2b_ref : [P, CHW_PAD]   bf16  0/1 channel -> spatial broadcaster
    # prm_ref : [4, P]         f32   rows = gamma1, beta1, gamma2, beta2
    # out_ref : [N, CHW_PAD]   f32
    x = x_ref[...]
    n = x.shape[0]
    p = w2t_ref.shape[1]
    kk = w2t_ref.shape[0] // p                       # 9 (conv1 out spatial)

    prm = prm_ref[...]
    g1, b1 = prm[0:1, :], prm[1:2, :]                # [1, P]
    g2, b2 = prm[2:3, :], prm[3:4, :]

    # ---- conv1: one native bf16 MXU matmul, f32 accumulation ----
    y1 = jnp.dot(x.astype(jnp.bfloat16), w1t_ref[...],
                 preferred_element_type=jnp.float32)             # [N, P*9]

    # ---- bn1 (training-mode batch stats, biased var), ONE stacked dot ----
    # HIGHEST keeps the E[x^2] - mean^2 path in true f32 (no bf16 rounding of
    # y1^2 before the cancellation-prone subtraction).
    stats = jnp.dot(jnp.concatenate([y1, y1 * y1], axis=0), e1r_ref[...],
                    precision=jax.lax.Precision.HIGHEST,
                    preferred_element_type=jnp.float32)          # [2N, P]
    cnt1 = float(n * kk)
    mean1 = jnp.sum(stats[0:n, :], axis=0, keepdims=True) / cnt1      # [1, P]
    ex2 = jnp.sum(stats[n:2 * n, :], axis=0, keepdims=True) / cnt1
    var1 = ex2 - mean1 * mean1
    a1 = g1 * jax.lax.rsqrt(var1 + EPS)                               # scale
    c1 = b1 - mean1 * a1                                              # shift
    # One broadcast dot for both scale and shift: [2, P] @ [P, P*9].
    acb = jnp.dot(jnp.concatenate([a1, c1], axis=0).astype(jnp.bfloat16),
                  e1b_ref[...], preferred_element_type=jnp.float32)
    y1 = jnp.maximum(y1 * acb[0:1, :] + acb[1:2, :], 0.0)        # bn1 + ReLU

    # ---- conv2 (1x1 spatial output): y1 IS its im2col operand ----
    y2 = jnp.dot(y1.astype(jnp.bfloat16), w2t_ref[...],
                 preferred_element_type=jnp.float32)             # [N, P]

    # ---- bn2 (batch stats over N samples only; 1x1 spatial), f32 VPU ----
    mean2 = jnp.sum(y2, axis=0, keepdims=True) / float(n)
    var2 = jnp.sum(y2 * y2, axis=0, keepdims=True) / float(n) - mean2 * mean2
    a2 = g2 * jax.lax.rsqrt(var2 + EPS)
    y2 = y2 * a2 + (b2 - mean2 * a2)                              # [N, P]

    # ---- residual add (conv2 output broadcasts over H*W) + final ReLU ----
    y2b = jnp.dot(y2.astype(jnp.bfloat16), e2b_ref[...],
                  preferred_element_type=jnp.float32)            # [N, CHW_PAD]
    out_ref[...] = jnp.maximum(y2b + x, 0.0)


# ------------------------------- glue (JAX) -------------------------------

def _full_spec(shape):
    nd = len(shape)
    return pl.BlockSpec(shape, lambda *_, _nd=nd: (0,) * _nd)


def make_basic_block_forward(params, H, W):
    """One-time host-side weight preparation + a jitted forward closure.

    Everything derived from the weights is built ONCE here with numpy; the
    per-call jitted path is reshape -> pad -> pallas_call -> slice -> reshape
    (the reshapes are free metadata ops).
    """
    w1, g1, b1, w2, g2, b2 = [np.asarray(p, np.float32) for p in params]
    P, C, KH, KW = w1.shape
    Ho, Wo = H - KH + 1, W - KW + 1
    KK = Ho * Wo                                  # conv1 output spatial (9)
    HW = H * W                                    # input spatial (25)
    # The module's `out + residual` only broadcasts when conv2's output is
    # 1x1 spatial and planes == inplanes.
    assert (Ho - KH + 1) == 1 and (Wo - KW + 1) == 1 and P == C

    CHW = C * H * W                               # 200
    CHW_PAD = ((CHW + 127) // 128) * 128          # 256 -> lane-dense in/out

    # conv1 as a Toeplitz ("kn2row") weight matrix: x_flat @ T == conv1(x).
    # Rows beyond CHW stay zero, so the lane padding of x contributes nothing.
    t = np.zeros((C, H, W, P, Ho, Wo), np.float32)
    w1_chwp = np.transpose(w1, (1, 2, 3, 0))      # [C, KH, KW, P]
    for i in range(Ho):
        for j in range(Wo):
            t[:, i:i + KH, j:j + KW, :, i, j] = w1_chwp
    w1t = np.zeros((CHW_PAD, P * KK), np.float32)
    w1t[:CHW, :] = t.reshape(CHW, P * KK)

    # conv2: 1x1-spatial output makes bn1/relu'd conv1 output its im2col
    # operand directly -> plain [P*9, P] matrix (rows ordered (c, ki, kj)).
    w2t = w2.reshape(P, C * KH * KW).T

    # 0/1 expand matrices, precomputed in exactly the orientation each dot
    # needs (no in-kernel iota/compare, no Mosaic relayout).
    e1r = np.kron(np.eye(P, dtype=np.float32),
                  np.ones((KK, 1), np.float32))           # [P*9, P]
    e1b = np.kron(np.eye(P, dtype=np.float32),
                  np.ones((1, KK), np.float32))           # [P, P*9]
    e2b = np.zeros((P, CHW_PAD), np.float32)
    e2b[:, :CHW] = np.kron(np.eye(P, dtype=np.float32),
                           np.ones((1, HW), np.float32))  # zero pad columns

    prm = np.stack([g1, b1, g2, b2], axis=0)              # [4, P], f32

    # MXU operands -> bf16 (default f32 MXU precision rounds to bf16 per pass
    # anyway; half the DMA/VMEM).  e1r stays f32: the stats dot runs HIGHEST.
    w1t_d = jnp.asarray(w1t, jnp.bfloat16)
    w2t_d = jnp.asarray(w2t, jnp.bfloat16)
    e1b_d = jnp.asarray(e1b, jnp.bfloat16)
    e2b_d = jnp.asarray(e2b, jnp.bfloat16)
    e1r_d = jnp.asarray(e1r, jnp.float32)
    prm_d = jnp.asarray(prm, jnp.float32)

    @jax.jit
    def forward(x):
        N = x.shape[0]
        x_rows = x.reshape(N, CHW)                         # free metadata op
        if CHW_PAD != CHW:                                 # lane-dense pad
            x_rows = jnp.pad(x_rows, ((0, 0), (0, CHW_PAD - CHW)))
        out2d = pl.pallas_call(
            _basic_block_kernel,
            out_shape=jax.ShapeDtypeStruct((N, CHW_PAD), jnp.float32),
            in_specs=[_full_spec((N, CHW_PAD)),
                      _full_spec(w1t_d.shape), _full_spec(w2t_d.shape),
                      _full_spec(e1r_d.shape), _full_spec(e1b_d.shape),
                      _full_spec(e2b_d.shape), _full_spec(prm_d.shape)],
            out_specs=_full_spec((N, CHW_PAD)),
        )(x_rows, w1t_d, w2t_d, e1r_d, e1b_d, e2b_d, prm_d)
        return out2d[:, :CHW].reshape(N, P, H, W)          # free metadata op

    return forward


# ------------------------- pure-JAX reference check -------------------------

def _reference(x, w1, g1, b1, w2, g2, b2):
    dn = ('NCHW', 'OIHW', 'NCHW')

    def conv(a, w):
        return jax.lax.conv_general_dilated(a, w, (1, 1), 'VALID',
                                            dimension_numbers=dn,
                                            precision=jax.lax.Precision.HIGHEST)

    def bn(y, g, b):
        m = jnp.mean(y, axis=(0, 2, 3), keepdims=True)
        v = jnp.mean((y - m) ** 2, axis=(0, 2, 3), keepdims=True)
        return (y - m) / jnp.sqrt(v + EPS) * g.reshape(1, -1, 1, 1) \
            + b.reshape(1, -1, 1, 1)

    out = jnp.maximum(bn(conv(x, w1), g1, b1), 0.0)
    out = bn(conv(out, w2), g2, b2)                    # [N, P, 1, 1]
    out = out + x                                      # broadcast residual add
    return jnp.maximum(out, 0.0)


# ---------------------------------- main ----------------------------------

if __name__ == "__main__":
    key = jax.random.PRNGKey(0)
    k1, k2, kx = jax.random.split(key, 3)

    # H=W=5 is the only spatial size for which this module's forward is valid;
    # inplanes must equal planes (conv2 takes `inplanes` inputs and the
    # residual add must broadcast).  N=8 fills the sublane dim nicely.
    N, C, H, W = 8, 8, 5, 5
    P = C  # planes == inplanes

    x = jax.random.normal(kx, (N, C, H, W), jnp.float32)
    # Conv2d(bias=False) weights: deterministic small random init.
    w1 = jax.random.normal(k1, (P, C, 3, 3), jnp.float32) * 0.1
    w2 = jax.random.normal(k2, (P, C, 3, 3), jnp.float32) * 0.1
    # BatchNorm2d default init: weight=1, bias=0.
    g1 = jnp.ones((P,), jnp.float32)
    b1 = jnp.zeros((P,), jnp.float32)
    g2 = jnp.ones((P,), jnp.float32)
    b2 = jnp.zeros((P,), jnp.float32)

    # TODO(synk): self.downsample is None in this configuration; a non-None
    # downsample module would need its own kernel and is not implemented here.

    forward = make_basic_block_forward((w1, g1, b1, w2, g2, b2), H, W)
    out = jax.block_until_ready(forward(x))

    ref = _reference(x, w1, g1, b1, w2, g2, b2)
    assert out.shape == (N, P, H, W)
    # conv1/conv2 still run at (bf16-pass) MXU precision vs the f32 HIGHEST
    # reference; the BN statistics path is now true f32 (HIGHEST stats dot),
    # so the remaining mismatch is just the conv rounding.
    np.testing.assert_allclose(np.asarray(out), np.asarray(ref),
                               atol=5e-2, rtol=5e-2)
    print("KERNEL_OK")
</pallas_src>

<mosaic_0001>
module attributes {stable_mosaic.version = 11 : i64} {
  func.func @_basic_block_kernel(%arg0: memref<8x256xf32, #tpu.memory_space<vmem>>, %arg1: memref<256x72xbf16, #tpu.memory_space<vmem>>, %arg2: memref<72x8xbf16, #tpu.memory_space<vmem>>, %arg3: memref<72x8xf32, #tpu.memory_space<vmem>>, %arg4: memref<8x72xbf16, #tpu.memory_space<vmem>>, %arg5: memref<8x256xbf16, #tpu.memory_space<vmem>>, %arg6: memref<4x8xf32, #tpu.memory_space<vmem>>, %arg7: memref<8x256xf32, #tpu.memory_space<vmem>>) attributes {dimension_semantics = [], scalar_prefetch = 0 : i64, scratch_operands = 0 : i64, tpu.core_type = #tpu.core_type<tc>} {
    %c0 = arith.constant 0 : index
    %c0_0 = arith.constant 0 : index
    %0 = vector.load %arg0[%c0, %c0_0] : memref<8x256xf32, #tpu.memory_space<vmem>>, vector<8x256xf32>
    %c0_1 = arith.constant 0 : index
    %c0_2 = arith.constant 0 : index
    %1 = vector.load %arg6[%c0_1, %c0_2] : memref<4x8xf32, #tpu.memory_space<vmem>>, vector<4x8xf32>
    %2 = vector.extract_strided_slice %1 {offsets = [0, 0], sizes = [1, 8], strides = [1, 1]} : vector<4x8xf32> to vector<1x8xf32>
    %3 = vector.extract_strided_slice %1 {offsets = [1, 0], sizes = [1, 8], strides = [1, 1]} : vector<4x8xf32> to vector<1x8xf32>
    %4 = vector.extract_strided_slice %1 {offsets = [2, 0], sizes = [1, 8], strides = [1, 1]} : vector<4x8xf32> to vector<1x8xf32>
    %5 = vector.extract_strided_slice %1 {offsets = [3, 0], sizes = [1, 8], strides = [1, 1]} : vector<4x8xf32> to vector<1x8xf32>
    %6 = arith.truncf %0 : vector<8x256xf32> to vector<8x256xbf16>
    %c0_3 = arith.constant 0 : index
    %c0_4 = arith.constant 0 : index
    %7 = vector.load %arg1[%c0_3, %c0_4] : memref<256x72xbf16, #tpu.memory_space<vmem>>, vector<256x72xbf16>
    %cst = arith.constant dense<0.000000e+00> : vector<8x72xf32>
    %8 = tpu.matmul %6, %7, %cst {dimension_numbers = #tpu.dot_dimension_numbers<[1], [0], [0], [1], [0, 0, 1, 1], [], []>} : vector<8x256xbf16>, vector<256x72xbf16>, vector<8x72xf32> -> vector<8x72xf32>
    %9 = arith.mulf %8, %8 : vector<8x72xf32>
    %10 = tpu.concatenate %8, %9 in 0 : vector<8x72xf32>, vector<8x72xf32> -> vector<16x72xf32>
    %c0_5 = arith.constant 0 : index
    %c0_6 = arith.constant 0 : index
    %11 = vector.load %arg3[%c0_5, %c0_6] : memref<72x8xf32, #tpu.memory_space<vmem>>, vector<72x8xf32>
    %cst_7 = arith.constant dense<0.000000e+00> : vector<16x8xf32>
    %12 = tpu.matmul %10, %11, %cst_7 {dimension_numbers = #tpu.dot_dimension_numbers<[1], [0], [0], [1], [0, 0, 1, 1], [], []>, precision = #tpu.contract_precision<fp32>} : vector<16x72xf32>, vector<72x8xf32>, vector<16x8xf32> -> vector<16x8xf32>
    %13 = vector.extract_strided_slice %12 {offsets = [0, 0], sizes = [8, 8], strides = [1, 1]} : vector<16x8xf32> to vector<8x8xf32>
    %cst_8 = arith.constant dense<0.000000e+00> : vector<8xf32>
    %14 = vector.multi_reduction <add>, %13, %cst_8 [0] : vector<8x8xf32> to vector<8xf32>
    %15 = vector.shape_cast %14 : vector<8xf32> to vector<1x8xf32>
    %cst_9 = arith.constant 7.200000e+01 : f32
    %16 = vector.broadcast %cst_9 : f32 to vector<1x8xf32>
    %17 = arith.divf %15, %16 : vector<1x8xf32>
    %18 = vector.extract_strided_slice %12 {offsets = [8, 0], sizes = [8, 8], strides = [1, 1]} : vector<16x8xf32> to vector<8x8xf32>
    %cst_10 = arith.constant dense<0.000000e+00> : vector<8xf32>
    %19 = vector.multi_reduction <add>, %18, %cst_10 [0] : vector<8x8xf32> to vector<8xf32>
    %20 = vector.shape_cast %19 : vector<8xf32> to vector<1x8xf32>
    %cst_11 = arith.constant 7.200000e+01 : f32
    %21 = vector.broadcast %cst_11 : f32 to vector<1x8xf32>
    %22 = arith.divf %20, %21 : vector<1x8xf32>
    %23 = arith.mulf %17, %17 : vector<1x8xf32>
    %24 = arith.subf %22, %23 : vector<1x8xf32>
    %cst_12 = arith.constant 9.99999974E-6 : f32
    %25 = vector.broadcast %cst_12 : f32 to vector<1x8xf32>
    %26 = arith.addf %24, %25 : vector<1x8xf32>
    %27 = math.rsqrt %26 : vector<1x8xf32>
    %28 = arith.mulf %2, %27 : vector<1x8xf32>
    %29 = arith.mulf %17, %28 : vector<1x8xf32>
    %30 = arith.subf %3, %29 : vector<1x8xf32>
    %31 = tpu.concatenate %28, %30 in 0 : vector<1x8xf32>, vector<1x8xf32> -> vector<2x8xf32>
    %32 = arith.truncf %31 : vector<2x8xf32> to vector<2x8xbf16>
    %c0_13 = arith.constant 0 : index
    %c0_14 = arith.constant 0 : index
    %33 = vector.load %arg4[%c0_13, %c0_14] : memref<8x72xbf16, #tpu.memory_space<vmem>>, vector<8x72xbf16>
    %cst_15 = arith.constant dense<0.000000e+00> : vector<2x72xf32>
    %34 = tpu.matmul %32, %33, %cst_15 {dimension_numbers = #tpu.dot_dimension_numbers<[1], [0], [0], [1], [0, 0, 1, 1], [], []>} : vector<2x8xbf16>, vector<8x72xbf16>, vector<2x72xf32> -> vector<2x72xf32>
    %35 = vector.extract_strided_slice %34 {offsets = [0, 0], sizes = [1, 72], strides = [1, 1]} : vector<2x72xf32> to vector<1x72xf32>
    %36 = vector.broadcast %35 : vector<1x72xf32> to vector<8x72xf32>
    %37 = arith.mulf %8, %36 : vector<8x72xf32>
    %38 = vector.extract_strided_slice %34 {offsets = [1, 0], sizes = [1, 72], strides = [1, 1]} : vector<2x72xf32> to vector<1x72xf32>
    %39 = vector.broadcast %38 : vector<1x72xf32> to vector<8x72xf32>
    %40 = arith.addf %37, %39 : vector<8x72xf32>
    %cst_16 = arith.constant 0.000000e+00 : f32
    %41 = vector.broadcast %cst_16 : f32 to vector<8x72xf32>
    %42 = arith.maximumf %40, %41 : vector<8x72xf32>
    %43 = arith.truncf %42 : vector<8x72xf32> to vector<8x72xbf16>
    %c0_17 = arith.constant 0 : index
    %c0_18 = arith.constant 0 : index
    %44 = vector.load %arg2[%c0_17, %c0_18] : memref<72x8xbf16, #tpu.memory_space<vmem>>, vector<72x8xbf16>
    %cst_19 = arith.constant dense<0.000000e+00> : vector<8x8xf32>
    %45 = tpu.matmul %43, %44, %cst_19 {dimension_numbers = #tpu.dot_dimension_numbers<[1], [0], [0], [1], [0, 0, 1, 1], [], []>} : vector<8x72xbf16>, vector<72x8xbf16>, vector<8x8xf32> -> vector<8x8xf32>
    %cst_20 = arith.constant dense<0.000000e+00> : vector<8xf32>
    %46 = vector.multi_reduction <add>, %45, %cst_20 [0] : vector<8x8xf32> to vector<8xf32>
    %47 = vector.shape_cast %46 : vector<8xf32> to vector<1x8xf32>
    %cst_21 = arith.constant 8.000000e+00 : f32
    %48 = vector.broadcast %cst_21 : f32 to vector<1x8xf32>
    %49 = arith.divf %47, %48 : vector<1x8xf32>
    %50 = arith.mulf %45, %45 : vector<8x8xf32>
    %cst_22 = arith.constant dense<0.000000e+00> : vector<8xf32>
    %51 = vector.multi_reduction <add>, %50, %cst_22 [0] : vector<8x8xf32> to vector<8xf32>
    %52 = vector.shape_cast %51 : vector<8xf32> to vector<1x8xf32>
    %cst_23 = arith.constant 8.000000e+00 : f32
    %53 = vector.broadcast %cst_23 : f32 to vector<1x8xf32>
    %54 = arith.divf %52, %53 : vector<1x8xf32>
    %55 = arith.mulf %49, %49 : vector<1x8xf32>
    %56 = arith.subf %54, %55 : vector<1x8xf32>
    %cst_24 = arith.constant 9.99999974E-6 : f32
    %57 = vector.broadcast %cst_24 : f32 to vector<1x8xf32>
    %58 = arith.addf %56, %57 : vector<1x8xf32>
    %59 = math.rsqrt %58 : vector<1x8xf32>
    %60 = arith.mulf %4, %59 : vector<1x8xf32>
    %61 = vector.broadcast %60 : vector<1x8xf32> to vector<8x8xf32>
    %62 = arith.mulf %45, %61 : vector<8x8xf32>
    %63 = arith.mulf %49, %60 : vector<1x8xf32>
    %64 = arith.subf %5, %63 : vector<1x8xf32>
    %65 = vector.broadcast %64 : vector<1x8xf32> to vector<8x8xf32>
    %66 = arith.addf %62, %65 : vector<8x8xf32>
    %67 = arith.truncf %66 : vector<8x8xf32> to vector<8x8xbf16>
    %c0_25 = arith.constant 0 : index
    %c0_26 = arith.constant 0 : index
    %68 = vector.load %arg5[%c0_25, %c0_26] : memref<8x256xbf16, #tpu.memory_space<vmem>>, vector<8x256xbf16>
    %cst_27 = arith.constant dense<0.000000e+00> : vector<8x256xf32>
    %69 = tpu.matmul %67, %68, %cst_27 {dimension_numbers = #tpu.dot_dimension_numbers<[1], [0], [0], [1], [0, 0, 1, 1], [], []>} : vector<8x8xbf16>, vector<8x256xbf16>, vector<8x256xf32> -> vector<8x256xf32>
    %70 = arith.addf %69, %0 : vector<8x256xf32>
    %cst_28 = arith.constant 0.000000e+00 : f32
    %71 = vector.broadcast %cst_28 : f32 to vector<8x256xf32>
    %72 = arith.maximumf %70, %71 : vector<8x256xf32>
    %c0_29 = arith.constant 0 : index
    %c0_30 = arith.constant 0 : index
    %73 = vector.load %arg7[%c0_29, %c0_30] : memref<8x256xf32, #tpu.memory_space<vmem>>, vector<8x256xf32>
    tpu.vector_store %arg7[%c0_29, %c0_30], %72 {strides = array<i32>} : memref<8x256xf32, #tpu.memory_space<vmem>>, vector<8x256xf32>,
    return
  }
}

</mosaic_0001>

<llo_original>
// kernel: forward.1
$region0: #{forward.1}
  #allocation0 [shape = 'u32[]', space=smem, size = 0x4, offset = 0x4, fixed_abs, tag = 'smem constant byte address 0x4 - core index']
  #allocation1 [shape = 'u32[72,128]{1,0:T(1,128)}', space=vmem, size = 0x9000, scoped, tag = 'internal scratch']
  %s0 = inlined_call_operand.vmem [shape: f32[8,256], index: 0, kind: input, shape index: {}]
  %s1 = inlined_call_operand.vmem [shape: bf16[256,72], index: 1, kind: input, shape index: {}]
  %s2 = inlined_call_operand.vmem [shape: bf16[72,8], index: 2, kind: input, shape index: {}]
  %s3 = inlined_call_operand.vmem [shape: f32[72,8], index: 3, kind: input, shape index: {}]
  %s4 = inlined_call_operand.vmem [shape: bf16[8,72], index: 4, kind: input, shape index: {}]
  %s5 = inlined_call_operand.vmem [shape: bf16[8,256], index: 5, kind: input, shape index: {}]
  %s6 = inlined_call_operand.vmem [shape: f32[4,8], index: 6, kind: input, shape index: {}]
  %s7 = inlined_call_operand.vmem [shape: f32[8,256], index: 7, kind: output, shape index: {}]
  %s8 = sld [smem:[#allocation0]]
  $region38: #{forward.1} parent=0
    _
  %s10 = ssub.s32 1, %s8
  %s11 = scalar_select 0, %s10, %s8
  // Predicated region
  $region2: #{forward.1} parent=0 // pred_check
    _
  $region3: #{forward.1} parent=0 // pred_check_branch
    %13 = sbr.rel (0) target = $region5
  $region4: #{forward.1} parent=0 // pred_region
    _
  $region5: #{forward.1} parent=0 // pred_fallthru
    _
  // Predicated region
  $region6: #{forward.1} parent=0 // pred_check
    _
  $region7: #{forward.1} parent=0 // pred_check_branch
    %15 = sbr.rel (0) target = $region9
  $region8: #{forward.1} parent=0 // pred_region
    _
  $region9: #{forward.1} parent=0 // pred_fallthru
    _
  // Predicated region
  $region10: #{forward.1} parent=0 // pred_check
    _
  $region11: #{forward.1} parent=0 // pred_check_branch
    %17 = sbr.rel (0) target = $region13
  $region12: #{forward.1} parent=0 // pred_region
    _
  $region13: #{forward.1} parent=0 // pred_fallthru
    _
  // Predicated region
  $region14: #{forward.1} parent=0 // pred_check
    _
  $region15: #{forward.1} parent=0 // pred_check_branch
    %19 = sbr.rel (0) target = $region17
  $region16: #{forward.1} parent=0 // pred_region
    _
  $region17: #{forward.1} parent=0 // pred_fallthru
    _
  // Predicated region
  $region18: #{forward.1} parent=0 // pred_check
    _
  $region19: #{forward.1} parent=0 // pred_check_branch
    %21 = sbr.rel (0) target = $region21
  $region20: #{forward.1} parent=0 // pred_region
    _
  $region21: #{forward.1} parent=0 // pred_fallthru
    _
  // Predicated region
  $region22: #{forward.1} parent=0 // pred_check
    _
  $region23: #{forward.1} parent=0 // pred_check_branch
    %23 = sbr.rel (0) target = $region25
  $region24: #{forward.1} parent=0 // pred_region
    _
  $region25: #{forward.1} parent=0 // pred_fallthru
    _
  // Predicated region
  $region26: #{forward.1} parent=0 // pred_check
    _
  $region27: #{forward.1} parent=0 // pred_check_branch
    %25 = sbr.rel (0) target = $region29
  $region28: #{forward.1} parent=0 // pred_region
    _
  $region29: #{forward.1} parent=0 // pred_fallthru
    _
  %v27 = vld [vmem:[%s0] sm:$0xff]
  %v28 = vld [vmem:[%s0 + $0x8] sm:$0xff]
  %v29 = vld [vmem:[%s6] sm:$0xf]
  %v30 = vpack.c.bf16 %v27, %v27
  %v31 = vpack.c.bf16 %v28, %v28
  %v32 = vld [vmem:[%s1] sm:$0xf]
  %v33 = vld [vmem:[%s1 + $0x4] sm:$0xf]
  %v34 = vld [vmem:[%s1 + $0x8] sm:$0xf]
  %v35 = vld [vmem:[%s1 + $0xc] sm:$0xf]
  %v36 = vld [vmem:[%s1 + $0x10] sm:$0xf]
  %v37 = vld [vmem:[%s1 + $0x14] sm:$0xf]
  %v38 = vld [vmem:[%s1 + $0x18] sm:$0xf]
  %v39 = vld [vmem:[%s1 + $0x1c] sm:$0xf]
  %v40 = vld [vmem:[%s1 + $0x20] sm:$0xf]
  %v41 = vld [vmem:[%s1 + $0x24] sm:$0xf]
  %v42 = vld [vmem:[%s1 + $0x28] sm:$0xf]
  %v43 = vld [vmem:[%s1 + $0x2c] sm:$0xf]
  %v44 = vld [vmem:[%s1 + $0x30] sm:$0xf]
  %v45 = vld [vmem:[%s1 + $0x34] sm:$0xf]
  %v46 = vld [vmem:[%s1 + $0x38] sm:$0xf]
  %v47 = vld [vmem:[%s1 + $0x3c] sm:$0xf]
  %v48 = vld [vmem:[%s1 + $0x40] sm:$0xf]
  %v49 = vld [vmem:[%s1 + $0x44] sm:$0xf]
  %v50 = vld [vmem:[%s1 + $0x48] sm:$0xf]
  %v51 = vld [vmem:[%s1 + $0x4c] sm:$0xf]
  %v52 = vld [vmem:[%s1 + $0x50] sm:$0xf]
  %v53 = vld [vmem:[%s1 + $0x54] sm:$0xf]
  %v54 = vld [vmem:[%s1 + $0x58] sm:$0xf]
  %v55 = vld [vmem:[%s1 + $0x5c] sm:$0xf]
  %v56 = vld [vmem:[%s1 + $0x60] sm:$0xf]
  %v57 = vld [vmem:[%s1 + $0x64] sm:$0xf]
  %v58 = vld [vmem:[%s1 + $0x68] sm:$0xf]
  %v59 = vld [vmem:[%s1 + $0x6c] sm:$0xf]
  %v60 = vld [vmem:[%s1 + $0x70] sm:$0xf]
  %v61 = vld [vmem:[%s1 + $0x74] sm:$0xf]
  %v62 = vld [vmem:[%s1 + $0x78] sm:$0xf]
  %v63 = vld [vmem:[%s1 + $0x7c] sm:$0xf]
  %v96 = vunpack.c.l.b16 %v32
  %v97 = vunpack.c.l.b16 %v33
  %v98 = vunpack.c.l.b16 %v34
  %v99 = vunpack.c.l.b16 %v35
  %v100 = vunpack.c.l.b16 %v36
  %v101 = vunpack.c.l.b16 %v37
  %v102 = vunpack.c.l.b16 %v38
  %v103 = vunpack.c.l.b16 %v39
  %v104 = vunpack.c.l.b16 %v40
  %v105 = vunpack.c.l.b16 %v41
  %v106 = vunpack.c.l.b16 %v42
  %v107 = vunpack.c.l.b16 %v43
  %v108 = vunpack.c.l.b16 %v44
  %v109 = vunpack.c.l.b16 %v45
  %v110 = vunpack.c.l.b16 %v46
  %v111 = vunpack.c.l.b16 %v47
  %v112 = vunpack.c.l.b16 %v48
  %v113 = vunpack.c.l.b16 %v49
  %v114 = vunpack.c.l.b16 %v50
  %v115 = vunpack.c.l.b16 %v51
  %v116 = vunpack.c.l.b16 %v52
  %v117 = vunpack.c.l.b16 %v53
  %v118 = vunpack.c.l.b16 %v54
  %v119 = vunpack.c.l.b16 %v55
  %v120 = vunpack.c.l.b16 %v56
  %v121 = vunpack.c.l.b16 %v57
  %v122 = vunpack.c.l.b16 %v58
  %v123 = vunpack.c.l.b16 %v59
  %v124 = vunpack.c.l.b16 %v60
  %v125 = vunpack.c.l.b16 %v61
  %v126 = vunpack.c.l.b16 %v62
  %v127 = vunpack.c.l.b16 %v63
  %v128 = vpack.c.b16 %v97, %v96
  %v129 = vpack.c.b16 %v99, %v98
  %v130 = vpack.c.b16 %v101, %v100
  %v131 = vpack.c.b16 %v103, %v102
  %v132 = vpack.c.b16 %v105, %v104
  %v133 = vpack.c.b16 %v107, %v106
  %v134 = vpack.c.b16 %v109, %v108
  %v135 = vpack.c.b16 %v111, %v110
  %v136 = vpack.c.b16 %v113, %v112
  %v137 = vpack.c.b16 %v115, %v114
  %v138 = vpack.c.b16 %v117, %v116
  %v139 = vpack.c.b16 %v119, %v118
  %v140 = vpack.c.b16 %v121, %v120
  %v141 = vpack.c.b16 %v123, %v122
  %v142 = vpack.c.b16 %v125, %v124
  %v143 = vpack.c.b16 %v127, %v126
  %160 = vmatpush.bf16.msra.mxu0 %v135
  %161 = vmatpush.bf16.msra.mxu0 %v134
  %162 = vmatpush.bf16.msra.mxu0 %v133
  %163 = vmatpush.bf16.msra.mxu0 %v132
  %164 = vmatpush.bf16.msra.mxu0 %v131
  %165 = vmatpush.bf16.msra.mxu0 %v130
  %166 = vmatpush.bf16.msra.mxu0 %v129
  %167 = vmatpush.bf16.msra.mxu0 %v128
  %168 = vmatmul.bf16.gmra.mxu0 %v30
  %v169 = vpop.f32.mrf.mxu0
  %v170 = vadd.f32 0.0, %v169
  %v171 = vpop.f32.mrf.mxu0
  %172 = vdwg.mxu0
  %173 = vmatpush.bf16.msra.mxu0 %v143
  %174 = vmatpush.bf16.msra.mxu0 %v142
  %175 = vmatpush.bf16.msra.mxu0 %v141
  %176 = vmatpush.bf16.msra.mxu0 %v140
  %177 = vmatpush.bf16.msra.mxu0 %v139
  %178 = vmatpush.bf16.msra.mxu0 %v138
  %179 = vmatpush.bf16.msra.mxu0 %v137
  %180 = vmatpush.bf16.msra.mxu0 %v136
  %181 = vmatmul.bf16.gmra.mxu0 %v31
  %v182 = vpop.f32.mrf.mxu0
  %v183 = vadd.f32 %v170, %v182
  %v184 = vpop.f32.mrf.mxu0
  %185 = vdwg.mxu0
  %v186 = vmul.f32 %v183, %v183
  %v187 = vld [vmem:[%s3] sm:$0xff]
  %v188 = vld [vmem:[%s3 + $0x8] sm:$0xff]
  %v189 = vld [vmem:[%s3 + $0x10] sm:$0xff]
  %v190 = vld [vmem:[%s3 + $0x18] sm:$0xff]
  %v191 = vld [vmem:[%s3 + $0x20] sm:$0xff]
  %v192 = vld [vmem:[%s3 + $0x28] sm:$0xff]
  %v193 = vld [vmem:[%s3 + $0x30] sm:$0xff]
  %v194 = vld [vmem:[%s3 + $0x38] sm:$0xff]
  %v195 = vld [vmem:[%s3 + $0x40] sm:$0xff]
  %vm196 = vcmask 588800
  %v198 = vsel %vm196, %v183, 0
  %v201 = vsel %vm196, %v186, 0
  %203 = vmatpush.msra.mxu0 0.0
  %204 = vmatpush.msra.mxu0 0.0
  %205 = vmatpush.msra.mxu0 0.0
  %206 = vmatpush.msra.mxu0 0.0
  %207 = vmatpush.msra.mxu0 0.0
  %208 = vmatpush.msra.mxu0 0.0
  %209 = vmatpush.msra.mxu0 0.0
  %v210 = vand.u32 %v195, 4294901760
  %211 = vmatpush.msra.mxu0 %v210
  %v212 = vand.u32 %v194, 4294901760
  %213 = vmatpush.msra.mxu0 %v212
  %v214 = vand.u32 %v193, 4294901760
  %215 = vmatpush.msra.mxu0 %v214
  %v216 = vand.u32 %v192, 4294901760
  %217 = vmatpush.msra.mxu0 %v216
  %v218 = vand.u32 %v191, 4294901760
  %219 = vmatpush.msra.mxu0 %v218
  %v220 = vand.u32 %v190, 4294901760
  %221 = vmatpush.msra.mxu0 %v220
  %v222 = vand.u32 %v189, 4294901760
  %223 = vmatpush.msra.mxu0 %v222
  %v224 = vand.u32 %v188, 4294901760
  %225 = vmatpush.msra.mxu0 %v224
  %v226 = vand.u32 %v187, 4294901760
  %227 = vmatpush.msra.mxu0 %v226
  %v228 = vand.u32 %v198, 4294901760
  %v229 = vsub.f32 %v198, %v228
  %v230 = vand.u32 %v229, 4294901760
  %v231 = vsub.f32 %v229, %v230
  %v232 = vand.u32 %v231, 4294901760
  %233 = vmatmul.f32.gmra.mxu0 %v232
  %v234 = vpop.f32.mrf.mxu0
  %v235 = vadd.f32 0.0, %v234
  %v236 = vand.u32 %v201, 4294901760
  %v237 = vsub.f32 %v201, %v236
  %v238 = vand.u32 %v237, 4294901760
  %v239 = vsub.f32 %v237, %v238
  %v240 = vand.u32 %v239, 4294901760
  %241 = vmatmul.f32.gmra.mxu0 %v240
  %v242 = vpop.f32.mrf.mxu0
  %v243 = vadd.f32 0.0, %v242
  %244 = vdwg.mxu0
  %245 = vmatpush.msra.mxu0 0.0
  %246 = vmatpush.msra.mxu0 0.0
  %247 = vmatpush.msra.mxu0 0.0
  %248 = vmatpush.msra.mxu0 0.0
  %249 = vmatpush.msra.mxu0 0.0
  %250 = vmatpush.msra.mxu0 0.0
  %251 = vmatpush.msra.mxu0 0.0
  %v252 = vand.u32 %v195, 4294901760
  %v253 = vsub.f32 %v195, %v252
  %v254 = vand.u32 %v253, 4294901760
  %v255 = vsub.f32 %v253, %v254
  %v256 = vand.u32 %v255, 4294901760
  %257 = vmatpush.msra.mxu0 %v256
  %v258 = vand.u32 %v194, 4294901760
  %v259 = vsub.f32 %v194, %v258
  %v260 = vand.u32 %v259, 4294901760
  %v261 = vsub.f32 %v259, %v260
  %v262 = vand.u32 %v261, 4294901760
  %263 = vmatpush.msra.mxu0 %v262
  %v264 = vand.u32 %v193, 4294901760
  %v265 = vsub.f32 %v193, %v264
  %v266 = vand.u32 %v265, 4294901760
  %v267 = vsub.f32 %v265, %v266
  %v268 = vand.u32 %v267, 4294901760
  %269 = vmatpush.msra.mxu0 %v268
  %v270 = vand.u32 %v192, 4294901760
  %v271 = vsub.f32 %v192, %v270
  %v272 = vand.u32 %v271, 4294901760
  %v273 = vsub.f32 %v271, %v272
  %v274 = vand.u32 %v273, 4294901760
  %275 = vmatpush.msra.mxu0 %v274
  %v276 = vand.u32 %v191, 4294901760
  %v277 = vsub.f32 %v191, %v276
  %v278 = vand.u32 %v277, 4294901760
  %v279 = vsub.f32 %v277, %v278
  %v280 = vand.u32 %v279, 4294901760
  %281 = vmatpush.msra.mxu0 %v280
  %v282 = vand.u32 %v190, 4294901760
  %v283 = vsub.f32 %v190, %v282
  %v284 = vand.u32 %v283, 4294901760
  %v285 = vsub.f32 %v283, %v284
  %v286 = vand.u32 %v285, 4294901760
  %287 = vmatpush.msra.mxu0 %v286
  %v288 = vand.u32 %v189, 4294901760
  %v289 = vsub.f32 %v189, %v288
  %v290 = vand.u32 %v289, 4294901760
  %v291 = vsub.f32 %v289, %v290
  %v292 = vand.u32 %v291, 4294901760
  %293 = vmatpush.msra.mxu0 %v292
  %v294 = vand.u32 %v188, 4294901760
  %v295 = vsub.f32 %v188, %v294
  %v296 = vand.u32 %v295, 4294901760
  %v297 = vsub.f32 %v295, %v296
  %v298 = vand.u32 %v297, 4294901760
  %299 = vmatpush.msra.mxu0 %v298
  %v300 = vand.u32 %v187, 4294901760
  %v301 = vsub.f32 %v187, %v300
  %v302 = vand.u32 %v301, 4294901760
  %v303 = vsub.f32 %v301, %v302
  %v304 = vand.u32 %v303, 4294901760
  %305 = vmatpush.msra.mxu0 %v304
  %v306 = vand.u32 %v198, 4294901760
  %307 = vmatmul.f32.gmra.mxu0 %v306
  %v308 = vpop.f32.mrf.mxu0
  %v309 = vadd.f32 %v235, %v308
  %v310 = vand.u32 %v201, 4294901760
  %311 = vmatmul.f32.gmra.mxu0 %v310
  %v312 = vpop.f32.mrf.mxu0
  %v313 = vadd.f32 %v243, %v312
  %314 = vdwg.mxu0
  %315 = vmatpush.msra.mxu0 0.0
  %316 = vmatpush.msra.mxu0 0.0
  %317 = vmatpush.msra.mxu0 0.0
  %318 = vmatpush.msra.mxu0 0.0
  %319 = vmatpush.msra.mxu0 0.0
  %320 = vmatpush.msra.mxu0 0.0
  %321 = vmatpush.msra.mxu0 0.0
  %v322 = vand.u32 %v195, 4294901760
  %v323 = vsub.f32 %v195, %v322
  %324 = vmatpush.msra.mxu0 %v323
  %v325 = vand.u32 %v194, 4294901760
  %v326 = vsub.f32 %v194, %v325
  %327 = vmatpush.msra.mxu0 %v326
  %v328 = vand.u32 %v193, 4294901760
  %v329 = vsub.f32 %v193, %v328
  %330 = vmatpush.msra.mxu0 %v329
  %v331 = vand.u32 %v192, 4294901760
  %v332 = vsub.f32 %v192, %v331
  %333 = vmatpush.msra.mxu0 %v332
  %v334 = vand.u32 %v191, 4294901760
  %v335 = vsub.f32 %v191, %v334
  %336 = vmatpush.msra.mxu0 %v335
  %v337 = vand.u32 %v190, 4294901760
  %v338 = vsub.f32 %v190, %v337
  %339 = vmatpush.msra.mxu0 %v338
  %v340 = vand.u32 %v189, 4294901760
  %v341 = vsub.f32 %v189, %v340
  %342 = vmatpush.msra.mxu0 %v341
  %v343 = vand.u32 %v188, 4294901760
  %v344 = vsub.f32 %v188, %v343
  %345 = vmatpush.msra.mxu0 %v344
  %v346 = vand.u32 %v187, 4294901760
  %v347 = vsub.f32 %v187, %v346
  %348 = vmatpush.msra.mxu0 %v347
  %v349 = vand.u32 %v198, 4294901760
  %v350 = vsub.f32 %v198, %v349
  %351 = vmatmul.f32.gmra.mxu0 %v350
  %v352 = vpop.f32.mrf.mxu0
  %v353 = vadd.f32 %v309, %v352
  %v354 = vand.u32 %v201, 4294901760
  %v355 = vsub.f32 %v201, %v354
  %356 = vmatmul.f32.gmra.mxu0 %v355
  %v357 = vpop.f32.mrf.mxu0
  %v358 = vadd.f32 %v313, %v357
  %359 = vdwg.mxu0
  %360 = vmatpush.msra.mxu0 0.0
  %361 = vmatpush.msra.mxu0 0.0
  %362 = vmatpush.msra.mxu0 0.0
  %363 = vmatpush.msra.mxu0 0.0
  %364 = vmatpush.msra.mxu0 0.0
  %365 = vmatpush.msra.mxu0 0.0
  %366 = vmatpush.msra.mxu0 0.0
  %v367 = vand.u32 %v195, 4294901760
  %368 = vmatpush.msra.mxu0 %v367
  %v369 = vand.u32 %v194, 4294901760
  %370 = vmatpush.msra.mxu0 %v369
  %v371 = vand.u32 %v193, 4294901760
  %372 = vmatpush.msra.mxu0 %v371
  %v373 = vand.u32 %v192, 4294901760
  %374 = vmatpush.msra.mxu0 %v373
  %v375 = vand.u32 %v191, 4294901760
  %376 = vmatpush.msra.mxu0 %v375
  %v377 = vand.u32 %v190, 4294901760
  %378 = vmatpush.msra.mxu0 %v377
  %v379 = vand.u32 %v189, 4294901760
  %380 = vmatpush.msra.mxu0 %v379
  %v381 = vand.u32 %v188, 4294901760
  %382 = vmatpush.msra.mxu0 %v381
  %v383 = vand.u32 %v187, 4294901760
  %384 = vmatpush.msra.mxu0 %v383
  %v385 = vand.u32 %v198, 4294901760
  %v386 = vsub.f32 %v198, %v385
  %v387 = vand.u32 %v386, 4294901760
  %388 = vmatmul.f32.gmra.mxu0 %v387
  %v389 = vpop.f32.mrf.mxu0
  %v390 = vadd.f32 %v353, %v389
  %v391 = vand.u32 %v201, 4294901760
  %v392 = vsub.f32 %v201, %v391
  %v393 = vand.u32 %v392, 4294901760
  %394 = vmatmul.f32.gmra.mxu0 %v393
  %v395 = vpop.f32.mrf.mxu0
  %v396 = vadd.f32 %v358, %v395
  %397 = vdwg.mxu0
  %398 = vmatpush.msra.mxu0 0.0
  %399 = vmatpush.msra.mxu0 0.0
  %400 = vmatpush.msra.mxu0 0.0
  %401 = vmatpush.msra.mxu0 0.0
  %402 = vmatpush.msra.mxu0 0.0
  %403 = vmatpush.msra.mxu0 0.0
  %404 = vmatpush.msra.mxu0 0.0
  %v405 = vand.u32 %v195, 4294901760
  %v406 = vsub.f32 %v195, %v405
  %v407 = vand.u32 %v406, 4294901760
  %408 = vmatpush.msra.mxu0 %v407
  %v409 = vand.u32 %v194, 4294901760
  %v410 = vsub.f32 %v194, %v409
  %v411 = vand.u32 %v410, 4294901760
  %412 = vmatpush.msra.mxu0 %v411
  %v413 = vand.u32 %v193, 4294901760
  %v414 = vsub.f32 %v193, %v413
  %v415 = vand.u32 %v414, 4294901760
  %416 = vmatpush.msra.mxu0 %v415
  %v417 = vand.u32 %v192, 4294901760
  %v418 = vsub.f32 %v192, %v417
  %v419 = vand.u32 %v418, 4294901760
  %420 = vmatpush.msra.mxu0 %v419
  %v421 = vand.u32 %v191, 4294901760
  %v422 = vsub.f32 %v191, %v421
  %v423 = vand.u32 %v422, 4294901760
  %424 = vmatpush.msra.mxu0 %v423
  %v425 = vand.u32 %v190, 4294901760
  %v426 = vsub.f32 %v190, %v425
  %v427 = vand.u32 %v426, 4294901760
  %428 = vmatpush.msra.mxu0 %v427
  %v429 = vand.u32 %v189, 4294901760
  %v430 = vsub.f32 %v189, %v429
  %v431 = vand.u32 %v430, 4294901760
  %432 = vmatpush.msra.mxu0 %v431
  %v433 = vand.u32 %v188, 4294901760
  %v434 = vsub.f32 %v188, %v433
  %v435 = vand.u32 %v434, 4294901760
  %436 = vmatpush.msra.mxu0 %v435
  %v437 = vand.u32 %v187, 4294901760
  %v438 = vsub.f32 %v187, %v437
  %v439 = vand.u32 %v438, 4294901760
  %440 = vmatpush.msra.mxu0 %v439
  %v441 = vand.u32 %v198, 4294901760
  %442 = vmatmul.f32.gmra.mxu0 %v441
  %v443 = vpop.f32.mrf.mxu0
  %v444 = vadd.f32 %v390, %v443
  %v445 = vand.u32 %v201, 4294901760
  %446 = vmatmul.f32.gmra.mxu0 %v445
  %v447 = vpop.f32.mrf.mxu0
  %v448 = vadd.f32 %v396, %v447
  %449 = vdwg.mxu0
  %450 = vmatpush.msra.mxu0 0.0
  %451 = vmatpush.msra.mxu0 0.0
  %452 = vmatpush.msra.mxu0 0.0
  %453 = vmatpush.msra.mxu0 0.0
  %454 = vmatpush.msra.mxu0 0.0
  %455 = vmatpush.msra.mxu0 0.0
  %456 = vmatpush.msra.mxu0 0.0
  %v457 = vand.u32 %v195, 4294901760
  %458 = vmatpush.msra.mxu0 %v457
  %v459 = vand.u32 %v194, 4294901760
  %460 = vmatpush.msra.mxu0 %v459
  %v461 = vand.u32 %v193, 4294901760
  %462 = vmatpush.msra.mxu0 %v461
  %v463 = vand.u32 %v192, 4294901760
  %464 = vmatpush.msra.mxu0 %v463
  %v465 = vand.u32 %v191, 4294901760
  %466 = vmatpush.msra.mxu0 %v465
  %v467 = vand.u32 %v190, 4294901760
  %468 = vmatpush.msra.mxu0 %v467
  %v469 = vand.u32 %v189, 4294901760
  %470 = vmatpush.msra.mxu0 %v469
  %v471 = vand.u32 %v188, 4294901760
  %472 = vmatpush.msra.mxu0 %v471
  %v473 = vand.u32 %v187, 4294901760
  %474 = vmatpush.msra.mxu0 %v473
  %v475 = vand.u32 %v198, 4294901760
  %476 = vmatmul.f32.gmra.mxu0 %v475
  %v477 = vpop.f32.mrf.mxu0
  %v478 = vadd.f32 %v444, %v477
  %v479 = vand.u32 %v201, 4294901760
  %480 = vmatmul.f32.gmra.mxu0 %v479
  %v481 = vpop.f32.mrf.mxu0
  %v482 = vadd.f32 %v448, %v481
  %483 = vdwg.mxu0
  %vm484 = vcmask 64512
  %v485 = vsel %vm484, %v478, 0.0
  %v486 = vrot.slane %v485, 4
  %v487 = vadd.f32 %v485, %v486
  %v488 = vrot.slane %v487, 2
  %v489 = vadd.f32 %v487, %v488
  %v490 = vrot.slane %v489, 1
  %v491 = vadd.f32 %v489, %v490
  %v492 = vrcp.pop 72.0
  %v493 = vmul.f32 72.0, %v492
  %v494 = vsub.f32 1.0, %v493
  %v495 = vmul.f32 %v492, %v494
  %v496 = vadd.f32 %v492, %v495
  %vm497 = vweird.f32 %v492
  %v498 = vsel %vm497, %v492, %v496
  %v499 = vmul.f32 %v491, %v498
  %v500 = vsel %vm484, %v482, 0.0
  %v501 = vrot.slane %v500, 4
  %v502 = vadd.f32 %v500, %v501
  %v503 = vrot.slane %v502, 2
  %v504 = vadd.f32 %v502, %v503
  %v505 = vrot.slane %v504, 1
  %v506 = vadd.f32 %v504, %v505
  %v507 = vmul.f32 %v506, %v498
  %v508 = vmul.f32 %v499, %v499
  %v509 = vsub.f32 %v507, %v508
  %v510 = vadd.f32 %v509, 1e-05
  %v511 = vrsqrt.pop %v510
  %v512 = vmul.f32 %v511, %v510
  %v513 = vmul.f32 %v512, %v511
  %v514 = vmul.f32 0.5, %v513
  %v515 = vsub.f32 1.5, %v514
  %v516 = vmul.f32 %v511, %v515
  %vm517 = vweird.f32 %v510
  %vm518 = vweird.f32 %v511
  %vm519 = vmor %vm517, %vm518
  %v520 = vsel %vm519, %v511, %v516
  %v521 = vmul.f32 %v29, %v520
  %v522 = vmul.f32 %v499, %v521
  %v524 = vrot.slane %v522, 7
  %v526 = vsub.f32 %v29, %v524
  %vm527 = vcmask 1040384
  %v528 = vsel %vm527, %v521, %v526
  %v529 = vpack.c.bf16 %v528, %v528
  %v530 = vld [vmem:[%s4] sm:$0xf]
  %v532 = vsel %vm484, %v529, 0
  %vm534 = vcmask 1043456
  %v536 = vsel %vm534, %v530, 0
  %538 = vmatpush.bf16.msra.mxu0 0
  %539 = vmatpush.bf16.msra.mxu0 0
  %540 = vmatpush.bf16.msra.mxu0 0
  %541 = vmatpush.bf16.msra.mxu0 0
  %542 = vmatpush.bf16.msra.mxu0 0
  %543 = vmatpush.bf16.msra.mxu0 0
  %544 = vmatpush.bf16.msra.mxu0 0
  %545 = vmatpush.bf16.msra.mxu0 %v536
  %546 = vmatmul.bf16.gmra.mxu0 %v532
  %v547 = vpop.f32.mrf.mxu0
  %v548 = vadd.f32 0.0, %v547
  %v549 = vpop.f32.mrf.mxu0
  %550 = vdwg.mxu0
  %v551 = vperm.slane %v548, 0
  %v552 = vmul.f32 %v183, %v551
  %v553 = vperm.slane %v548, 1
  %v554 = vadd.f32 %v552, %v553
  %v555 = vmax.f32 %v554, 0.0
  %v556 = vpack.c.bf16 %v555, %v555
  %v557 = vld [vmem:[%s2] sm:$0xf]
  %v558 = vld [vmem:[%s2 + $0x4] sm:$0xf]
  %v559 = vld [vmem:[%s2 + $0x8] sm:$0xf]
  %v560 = vld [vmem:[%s2 + $0xc] sm:$0xf]
  %v561 = vld [vmem:[%s2 + $0x10] sm:$0xf]
  %v562 = vld [vmem:[%s2 + $0x14] sm:$0xf]
  %v563 = vld [vmem:[%s2 + $0x18] sm:$0xf]
  %v564 = vld [vmem:[%s2 + $0x1c] sm:$0xf]
  %v565 = vld [vmem:[%s2 + $0x20] sm:$0xf]
  %v575 = vunpack.c.l.b16 %v557
  %v576 = vunpack.c.l.b16 %v558
  %v577 = vunpack.c.l.b16 %v559
  %v578 = vunpack.c.l.b16 %v560
  %v579 = vunpack.c.l.b16 %v561
  %v580 = vunpack.c.l.b16 %v562
  %v581 = vunpack.c.l.b16 %v563
  %v582 = vunpack.c.l.b16 %v564
  %v583 = vunpack.c.l.b16 %v565
  %v584 = vpack.c.b16 %v576, %v575
  %v585 = vpack.c.b16 %v578, %v577
  %v586 = vpack.c.b16 %v580, %v579
  %v587 = vpack.c.b16 %v582, %v581
  %v588 = vpack.c.b16 %v583, %v583
  %v594 = vsel %vm196, %v556, 0
  %v597 = vsel %vm534, %v588, 0
  %599 = vmatpush.bf16.msra.mxu0 0
  %600 = vmatpush.bf16.msra.mxu0 0
  %601 = vmatpush.bf16.msra.mxu0 0
  %602 = vmatpush.bf16.msra.mxu0 %v597
  %603 = vmatpush.bf16.msra.mxu0 %v587
  %604 = vmatpush.bf16.msra.mxu0 %v586
  %605 = vmatpush.bf16.msra.mxu0 %v585
  %606 = vmatpush.bf16.msra.mxu0 %v584
  %607 = vmatmul.bf16.gmra.mxu0 %v594
  %v608 = vpop.f32.mrf.mxu0
  %v609 = vadd.f32 0.0, %v608
  %v610 = vpop.f32.mrf.mxu0
  %611 = vdwg.mxu0
  %v612 = vsel %vm484, %v609, 0.0
  %v613 = vrot.slane %v612, 4
  %v614 = vadd.f32 %v612, %v613
  %v615 = vrot.slane %v614, 2
  %v616 = vadd.f32 %v614, %v615
  %v617 = vrot.slane %v616, 1
  %v618 = vadd.f32 %v616, %v617
  %v619 = vrcp.pop 8.0
  %v620 = vmul.f32 8.0, %v619
  %v621 = vsub.f32 1.0, %v620
  %v622 = vmul.f32 %v619, %v621
  %v623 = vadd.f32 %v619, %v622
  %vm624 = vweird.f32 %v619
  %v625 = vsel %vm624, %v619, %v623
  %v626 = vmul.f32 %v618, %v625
  %v627 = vmul.f32 %v609, %v609
  %v628 = vsel %vm484, %v627, 0.0
  %v629 = vrot.slane %v628, 4
  %v630 = vadd.f32 %v628, %v629
  %v631 = vrot.slane %v630, 2
  %v632 = vadd.f32 %v630, %v631
  %v633 = vrot.slane %v632, 1
  %v634 = vadd.f32 %v632, %v633
  %v635 = vmul.f32 %v634, %v625
  %v636 = vmul.f32 %v626, %v626
  %v637 = vsub.f32 %v635, %v636
  %v638 = vadd.f32 %v637, 1e-05
  %v639 = vrsqrt.pop %v638
  %v640 = vmul.f32 %v639, %v638
  %v641 = vmul.f32 %v640, %v639
  %v642 = vmul.f32 0.5, %v641
  %v643 = vsub.f32 1.5, %v642
  %v644 = vmul.f32 %v639, %v643
  %vm645 = vweird.f32 %v638
  %vm646 = vweird.f32 %v639
  %vm647 = vmor %vm645, %vm646
  %v648 = vsel %vm647, %v639, %v644
  %v649 = vmul.f32 %v29, %v648
  %v650 = vperm.slane %v649, 2
  %v651 = vmul.f32 %v609, %v650
  %v652 = vmul.f32 %v626, %v649
  %v654 = vrot.slane %v652, 7
  %v656 = vsub.f32 %v29, %v654
  %v657 = vperm.slane %v656, 3
  %v658 = vadd.f32 %v651, %v657
  %v659 = vpack.c.bf16 %v658, %v658
  %v660 = vld [vmem:[%s5] sm:$0xff]
  %v662 = vunpack.c.l.b16 %v660
  %v663 = vunpack.c.h.b16 %v660
  %v664 = vpack.c.b16 %v662, %v662
  %v665 = vpack.c.b16 %v663, %v663
  %v667 = vsel %vm484, %v659, 0
  %v670 = vsel %vm534, %v664, 0
  %v673 = vsel %vm534, %v665, 0
  %675 = vmatpush.bf16.msra.mxu0 0
  %676 = vmatpush.bf16.msra.mxu0 0
  %677 = vmatpush.bf16.msra.mxu0 0
  %678 = vmatpush.bf16.msra.mxu0 0
  %679 = vmatpush.bf16.msra.mxu0 0
  %680 = vmatpush.bf16.msra.mxu0 0
  %681 = vmatpush.bf16.msra.mxu0 0
  %682 = vmatpush.bf16.msra.mxu0 %v670
  %683 = vmatmul.bf16.gmra.mxu0 %v667
  %v684 = vpop.f32.mrf.mxu0
  %v685 = vadd.f32 %v27, %v684
  %v686 = vpop.f32.mrf.mxu0
  %687 = vdwg.mxu0
  %688 = vmatpush.bf16.msra.mxu0 0
  %689 = vmatpush.bf16.msra.mxu0 0
  %690 = vmatpush.bf16.msra.mxu0 0
  %691 = vmatpush.bf16.msra.mxu0 0
  %692 = vmatpush.bf16.msra.mxu0 0
  %693 = vmatpush.bf16.msra.mxu0 0
  %694 = vmatpush.bf16.msra.mxu0 0
  %695 = vmatpush.bf16.msra.mxu0 %v673
  %696 = vmatmul.bf16.gmra.mxu0 %v667
  %v697 = vpop.f32.mrf.mxu0
  %v698 = vadd.f32 %v28, %v697
  %v699 = vpop.f32.mrf.mxu0
  %700 = vdwg.mxu0
  %v701 = vmax.f32 %v685, 0.0
  %v702 = vmax.f32 %v698, 0.0
  %703 = vst [vmem:[%s7] sm:$0xff] %v701
  %704 = vst [vmem:[%s7 + $0x8] sm:$0xff] %v702
  // Predicated region
  $region30: #{forward.1} parent=0 // pred_check
    _
  $region31: #{forward.1} parent=0 // pred_check_branch
    %706 = sbr.rel (0) target = $region33
  $region32: #{forward.1} parent=0 // pred_region
    _
  $region33: #{forward.1} parent=0 // pred_fallthru
    _
  // Predicated region
  $region34: #{forward.1} parent=0 // pred_check
    _
  $region35: #{forward.1} parent=0 // pred_check_branch
    %708 = sbr.rel (0) target = $region37
  $region36: #{forward.1} parent=0 // pred_region
    _
  $region37: #{forward.1} parent=0 // pred_fallthru
    _

</llo_original>
